<compile_context>
chip_gen: v7x
topology: tpu7x:2x2x1
jax: 0.10.0
libtpu: 0.0.40
codegen_flags: <defaults>
</compile_context>

<pallas_src>
import functools
import math

import jax
import jax.numpy as jnp
from jax.experimental import pallas as pl
from jax.experimental.pallas import tpu as pltpu


def _arcface_kernel(x_ref, wt_ref, labels_ref, l_ref,
                    xn_ref, excl_ref, t_ref, *, s, cos_m, sin_m, eps):
    j = pl.program_id(1)
    tc = wt_ref.shape[1]

    # ---- once per row-tile: L2-normalize x rows (rsqrt * mul) and zero the accumulators.
    @pl.when(j == 0)
    def _init():
        x = x_ref[...].astype(jnp.float32)
        # max(sumsq, 1e-24) == clamping the norm at 1e-12, same as F.normalize.
        inv = jax.lax.rsqrt(jnp.maximum(jnp.sum(x * x, axis=1, keepdims=True), 1e-24))
        xn_ref[...] = (x * inv).astype(xn_ref.dtype)
        excl_ref[...] = jnp.zeros_like(excl_ref)
        t_ref[...] = jnp.zeros_like(t_ref)

    # ---- normalize this (D, tc) weight slab column-wise (class vectors on the lane axis).
    wt = wt_ref[...].astype(jnp.float32)
    winv = jax.lax.rsqrt(jnp.maximum(jnp.sum(wt * wt, axis=0, keepdims=True), 1e-24))
    wn = (wt * winv).astype(xn_ref.dtype)

    # ---- cosine logits for this (tn, tc) tile: natural-layout MXU matmul, f32 accumulate.
    wf = jnp.dot(xn_ref[...], wn, preferred_element_type=jnp.float32)        # (tn, tc)

    labels = labels_ref[...]                                                  # (tn, 1) int32
    col = j * tc + jax.lax.broadcasted_iota(jnp.int32, wf.shape, 1)           # global class id
    is_tgt = col == labels

    # Shift exponents by s (cos <= 1) -> exponents <= 0, no overflow for any s.
    e = jnp.exp(s * wf - s)
    excl_ref[...] += jnp.sum(jnp.where(is_tgt, 0.0, e), axis=1, keepdims=True)
    t_ref[...] += jnp.sum(jnp.where(is_tgt, wf, 0.0), axis=1, keepdims=True)

    # ---- after the last class tile: apply the angular margin and write the per-row loss.
    @pl.when(j == pl.num_programs(1) - 1)
    def _finalize():
        t = jnp.clip(t_ref[...], -1.0 + eps, 1.0 - eps)
        # cos(acos(t) + m) == t*cos(m) - sqrt(1 - t^2)*sin(m)   (exact for t in (-1, 1))
        num = s * (t * cos_m - jnp.sqrt(1.0 - t * t) * sin_m)
        # Undo the exponent shift: log(exp(num) + excl) == s + log(exp(num - s) + excl_shifted)
        l_ref[...] = num - (s + jnp.log(jnp.exp(num - s) + excl_ref[...]))


def _pick_tile(dim, max_tile, quantum):
    """Largest tile <= max_tile that divides `dim` and is a multiple of `quantum`;
    falls back to the full dim (always a legal block)."""
    if dim <= max_tile:
        return dim
    t = (max_tile // quantum) * quantum
    while t >= quantum:
        if dim % t == 0:
            return t
        t -= quantum
    return dim


def angular_penalty_sm_loss(x, weight, labels, *, loss_type="arcface",
                            s=None, m=None, eps=1e-7, mxu_dtype=jnp.bfloat16):
    """ArcFace angular-penalty softmax loss, forward only (matches the PyTorch module)."""
    loss_type = loss_type.lower()
    assert loss_type == "arcface"  # TODO(synk): cosface/sphereface variants not wired up
    s = 64.0 if s is None else float(s)
    m = 0.5 if m is None else float(m)
    # Static Python constants (fixes the ConcretizationTypeError of float(jnp.cos(m))).
    cos_m, sin_m = math.cos(m), math.sin(m)

    n, d = x.shape
    c = weight.shape[0]
    assert weight.shape[1] == d

    # nn.Linear stores W as (C, D); present it as (D, C) so the kernel matmul needs no transpose.
    w_t = jnp.transpose(weight)
    labels_2d = labels.astype(jnp.int32).reshape(n, 1)

    tn = _pick_tile(n, 256, 8)      # row tile (parallel axis)
    tc = _pick_tile(c, 512, 128)    # class tile (reduction axis, fits v7x 64 MiB VMEM budget)
    grid = (n // tn, c // tc)

    kernel = functools.partial(_arcface_kernel, s=s, cos_m=cos_m, sin_m=sin_m, eps=float(eps))

    cost = pl.CostEstimate(
        flops=2 * n * c * d + 8 * n * c,
        transcendentals=n * c + 2 * n + c,
        bytes_accessed=4 * (n * d + grid[0] * d * c + 2 * n),
    )

    per_row = pl.pallas_call(
        kernel,
        out_shape=jax.ShapeDtypeStruct((n, 1), jnp.float32),
        grid_spec=pltpu.PrefetchScalarGridSpec(
            num_scalar_prefetch=0,
            grid=grid,
            in_specs=[
                pl.BlockSpec((tn, d), lambda i, j: (i, 0)),   # x rows
                pl.BlockSpec((d, tc), lambda i, j: (0, j)),   # W^T class slab
                pl.BlockSpec((tn, 1), lambda i, j: (i, 0)),   # labels
            ],
            out_specs=pl.BlockSpec((tn, 1), lambda i, j: (i, 0)),
            scratch_shapes=[
                pltpu.VMEM((tn, d), mxu_dtype),    # cached normalized x rows (MXU operand)
                pltpu.VMEM((tn, 1), jnp.float32),  # running excluded-class exp sum
                pltpu.VMEM((tn, 1), jnp.float32),  # running target cosine
            ],
        ),
        compiler_params=pltpu.CompilerParams(
            dimension_semantics=("parallel", "arbitrary"),
            vmem_limit_bytes=32 * 1024 * 1024,
        ),
        cost_estimate=cost,
    )(x, w_t, labels_2d)

    return -jnp.mean(per_row[:, 0])


def _reference(x, weight, labels, *, s=64.0, m=0.5, eps=1e-7):
    xn = x / jnp.maximum(jnp.linalg.norm(x, axis=1, keepdims=True), 1e-12)
    wn = weight / jnp.maximum(jnp.linalg.norm(weight, axis=1, keepdims=True), 1e-12)
    wf = xn @ wn.T
    t = wf[jnp.arange(x.shape[0]), labels]
    t = jnp.clip(t, -1.0 + eps, 1.0 - eps)
    numerator = s * jnp.cos(jnp.arccos(t) + m)
    mask = jax.nn.one_hot(labels, weight.shape[0])
    excl = jnp.sum(jnp.exp(s * wf) * (1.0 - mask), axis=1)
    L = numerator - jnp.log(jnp.exp(numerator) + excl)
    return -jnp.mean(L)


if __name__ == "__main__":
    N, in_features, out_features = 16, 64, 1024   # exercises the class-dim tiling (tc=512, 2 tiles)

    key = jax.random.PRNGKey(0)
    kx, kw, kl = jax.random.split(key, 3)
    x = jax.random.normal(kx, (N, in_features), dtype=jnp.float32)
    # nn.Linear(in, out, bias=False).weight has shape (out, in).
    weight = jax.random.normal(kw, (out_features, in_features), dtype=jnp.float32) * 0.1
    labels = jax.random.randint(kl, (N,), 0, out_features, dtype=jnp.int32)

    ref = _reference(x, weight, labels)

    # Exact path (f32 MXU inputs): tight match with the reference.
    loss_f32 = jax.block_until_ready(
        angular_penalty_sm_loss(x, weight, labels, mxu_dtype=jnp.float32))
    assert jnp.allclose(loss_f32, ref, rtol=1e-5, atol=1e-5), (loss_f32, ref)

    # Fast path (default bf16 MXU inputs, f32 accumulate). s=64 amplifies bf16 rounding of
    # the cosine logits, so the tolerance is correspondingly looser.
    loss_bf16 = jax.block_until_ready(angular_penalty_sm_loss(x, weight, labels))
    assert jnp.allclose(loss_bf16, ref, rtol=3e-2, atol=3e-2), (loss_bf16, ref)

    print("KERNEL_OK")
</pallas_src>

<mosaic_0001>
module attributes {stable_mosaic.version = 11 : i64} {
  func.func @_arcface_kernel(%arg0: i32, %arg1: i32, %arg2: memref<16x64xf32, #tpu.memory_space<vmem>>, %arg3: memref<64x512xf32, #tpu.memory_space<vmem>>, %arg4: memref<16x1xi32, #tpu.memory_space<vmem>>, %arg5: memref<16x1xf32, #tpu.memory_space<vmem>>, %arg6: memref<16x64xf32, #tpu.memory_space<vmem>>, %arg7: memref<16x1xf32, #tpu.memory_space<vmem>>, %arg8: memref<16x1xf32, #tpu.memory_space<vmem>>) attributes {dimension_semantics = [#tpu.dimension_semantics<parallel>, #tpu.dimension_semantics<arbitrary>], iteration_bounds = array<i64: 1, 2>, scalar_prefetch = 0 : i64, scratch_operands = 3 : i64, tpu.core_type = #tpu.core_type<tc>, window_params = [{transform_indices = @transform_0, window_bounds = array<i64: 16, 64>}, {transform_indices = @transform_1, window_bounds = array<i64: 64, 512>}, {transform_indices = @transform_2, window_bounds = array<i64: 16, 1>}, {transform_indices = @transform_3, window_bounds = array<i64: 16, 1>}]} {
    %c0_i32 = arith.constant 0 : i32
    %0 = arith.cmpi eq, %arg1, %c0_i32 : i32
    %1 = arith.extui %0 : i1 to i32
    %c0_i32_0 = arith.constant 0 : i32
    %2 = arith.cmpi ne, %1, %c0_i32_0 : i32
    scf.if %2 {
      %c0_23 = arith.constant 0 : index
      %c0_24 = arith.constant 0 : index
      %43 = vector.load %arg2[%c0_23, %c0_24] : memref<16x64xf32, #tpu.memory_space<vmem>>, vector<16x64xf32>
      %44 = arith.mulf %43, %43 : vector<16x64xf32>
      %cst_25 = arith.constant dense<0.000000e+00> : vector<16xf32>
      %45 = vector.multi_reduction <add>, %44, %cst_25 [1] : vector<16x64xf32> to vector<16xf32>
      %46 = vector.shape_cast %45 : vector<16xf32> to vector<16x1xf32>
      %cst_26 = arith.constant 1.000000e-24 : f32
      %47 = vector.broadcast %cst_26 : f32 to vector<16x1xf32>
      %48 = arith.maximumf %46, %47 : vector<16x1xf32>
      %49 = math.rsqrt %48 : vector<16x1xf32>
      %50 = vector.broadcast %49 : vector<16x1xf32> to vector<16x64xf32>
      %51 = arith.mulf %43, %50 : vector<16x64xf32>
      %c0_27 = arith.constant 0 : index
      %c0_28 = arith.constant 0 : index
      %52 = vector.load %arg6[%c0_27, %c0_28] : memref<16x64xf32, #tpu.memory_space<vmem>>, vector<16x64xf32>
      tpu.vector_store %arg6[%c0_27, %c0_28], %51 {strides = array<i32>} : memref<16x64xf32, #tpu.memory_space<vmem>>, vector<16x64xf32>,
      %cst_29 = arith.constant 0.000000e+00 : f32
      %53 = vector.broadcast %cst_29 : f32 to vector<16x1xf32>
      %c0_30 = arith.constant 0 : index
      %c0_31 = arith.constant 0 : index
      %54 = vector.load %arg7[%c0_30, %c0_31] : memref<16x1xf32, #tpu.memory_space<vmem>>, vector<16x1xf32>
      tpu.vector_store %arg7[%c0_30, %c0_31], %53 {strides = array<i32>} : memref<16x1xf32, #tpu.memory_space<vmem>>, vector<16x1xf32>,
      %cst_32 = arith.constant 0.000000e+00 : f32
      %55 = vector.broadcast %cst_32 : f32 to vector<16x1xf32>
      %c0_33 = arith.constant 0 : index
      %c0_34 = arith.constant 0 : index
      %56 = vector.load %arg8[%c0_33, %c0_34] : memref<16x1xf32, #tpu.memory_space<vmem>>, vector<16x1xf32>
      tpu.vector_store %arg8[%c0_33, %c0_34], %55 {strides = array<i32>} : memref<16x1xf32, #tpu.memory_space<vmem>>, vector<16x1xf32>,
    } else {
    }
    %c0 = arith.constant 0 : index
    %c0_1 = arith.constant 0 : index
    %3 = vector.load %arg3[%c0, %c0_1] : memref<64x512xf32, #tpu.memory_space<vmem>>, vector<64x512xf32>
    %4 = arith.mulf %3, %3 : vector<64x512xf32>
    %cst = arith.constant dense<0.000000e+00> : vector<512xf32>
    %5 = vector.multi_reduction <add>, %4, %cst [0] : vector<64x512xf32> to vector<512xf32>
    %6 = vector.shape_cast %5 : vector<512xf32> to vector<1x512xf32>
    %cst_2 = arith.constant 1.000000e-24 : f32
    %7 = vector.broadcast %cst_2 : f32 to vector<1x512xf32>
    %8 = arith.maximumf %6, %7 : vector<1x512xf32>
    %9 = math.rsqrt %8 : vector<1x512xf32>
    %10 = vector.broadcast %9 : vector<1x512xf32> to vector<64x512xf32>
    %11 = arith.mulf %3, %10 : vector<64x512xf32>
    %c0_3 = arith.constant 0 : index
    %c0_4 = arith.constant 0 : index
    %12 = vector.load %arg6[%c0_3, %c0_4] : memref<16x64xf32, #tpu.memory_space<vmem>>, vector<16x64xf32>
    %cst_5 = arith.constant dense<0.000000e+00> : vector<16x512xf32>
    %13 = tpu.matmul %12, %11, %cst_5 {dimension_numbers = #tpu.dot_dimension_numbers<[1], [0], [0], [1], [0, 0, 1, 1], [], []>} : vector<16x64xf32>, vector<64x512xf32>, vector<16x512xf32> -> vector<16x512xf32>
    %c0_6 = arith.constant 0 : index
    %c0_7 = arith.constant 0 : index
    %14 = vector.load %arg4[%c0_6, %c0_7] : memref<16x1xi32, #tpu.memory_space<vmem>>, vector<16x1xi32>
    %c512_i32 = arith.constant 512 : i32
    %15 = arith.muli %arg1, %c512_i32 : i32
    %16 = tpu.iota {dimensions = array<i32: 1>} : vector<16x512xi32>
    %17 = vector.broadcast %15 : i32 to vector<16x512xi32>
    %18 = arith.addi %17, %16 : vector<16x512xi32>
    %19 = vector.broadcast %14 : vector<16x1xi32> to vector<16x512xi32>
    %20 = arith.cmpi eq, %18, %19 : vector<16x512xi32>
    %cst_8 = arith.constant 6.400000e+01 : f32
    %21 = vector.broadcast %cst_8 : f32 to vector<16x512xf32>
    %22 = arith.mulf %21, %13 : vector<16x512xf32>
    %cst_9 = arith.constant 6.400000e+01 : f32
    %23 = vector.broadcast %cst_9 : f32 to vector<16x512xf32>
    %24 = arith.subf %22, %23 : vector<16x512xf32>
    %25 = math.exp %24 : vector<16x512xf32>
    %c0_10 = arith.constant 0 : index
    %c0_11 = arith.constant 0 : index
    %26 = vector.load %arg7[%c0_10, %c0_11] : memref<16x1xf32, #tpu.memory_space<vmem>>, vector<16x1xf32>
    %cst_12 = arith.constant 0.000000e+00 : f32
    %27 = vector.broadcast %cst_12 : f32 to vector<16x512xf32>
    %28 = arith.select %20, %27, %25 : vector<16x512xi1>, vector<16x512xf32>
    %cst_13 = arith.constant dense<0.000000e+00> : vector<16xf32>
    %29 = vector.multi_reduction <add>, %28, %cst_13 [1] : vector<16x512xf32> to vector<16xf32>
    %30 = vector.shape_cast %29 : vector<16xf32> to vector<16x1xf32>
    %31 = arith.addf %26, %30 : vector<16x1xf32>
    %c0_14 = arith.constant 0 : index
    %c0_15 = arith.constant 0 : index
    %32 = vector.load %arg7[%c0_14, %c0_15] : memref<16x1xf32, #tpu.memory_space<vmem>>, vector<16x1xf32>
    tpu.vector_store %arg7[%c0_14, %c0_15], %31 {strides = array<i32>} : memref<16x1xf32, #tpu.memory_space<vmem>>, vector<16x1xf32>,
    %c0_16 = arith.constant 0 : index
    %c0_17 = arith.constant 0 : index
    %33 = vector.load %arg8[%c0_16, %c0_17] : memref<16x1xf32, #tpu.memory_space<vmem>>, vector<16x1xf32>
    %cst_18 = arith.constant 0.000000e+00 : f32
    %34 = vector.broadcast %cst_18 : f32 to vector<16x512xf32>
    %35 = arith.select %20, %13, %34 : vector<16x512xi1>, vector<16x512xf32>
    %cst_19 = arith.constant dense<0.000000e+00> : vector<16xf32>
    %36 = vector.multi_reduction <add>, %35, %cst_19 [1] : vector<16x512xf32> to vector<16xf32>
    %37 = vector.shape_cast %36 : vector<16xf32> to vector<16x1xf32>
    %38 = arith.addf %33, %37 : vector<16x1xf32>
    %c0_20 = arith.constant 0 : index
    %c0_21 = arith.constant 0 : index
    %39 = vector.load %arg8[%c0_20, %c0_21] : memref<16x1xf32, #tpu.memory_space<vmem>>, vector<16x1xf32>
    tpu.vector_store %arg8[%c0_20, %c0_21], %38 {strides = array<i32>} : memref<16x1xf32, #tpu.memory_space<vmem>>, vector<16x1xf32>,
    %c1_i32 = arith.constant 1 : i32
    %40 = arith.cmpi eq, %arg1, %c1_i32 : i32
    %41 = arith.extui %40 : i1 to i32
    %c0_i32_22 = arith.constant 0 : i32
    %42 = arith.cmpi ne, %41, %c0_i32_22 : i32
    scf.if %42 {
      %c0_23 = arith.constant 0 : index
      %c0_24 = arith.constant 0 : index
      %43 = vector.load %arg8[%c0_23, %c0_24] : memref<16x1xf32, #tpu.memory_space<vmem>>, vector<16x1xf32>
      %cst_25 = arith.constant -0.99999988 : f32
      %cst_26 = arith.constant 0.99999988 : f32
      %44 = vector.broadcast %cst_25 : f32 to vector<16x1xf32>
      %45 = arith.maximumf %44, %43 : vector<16x1xf32>
      %46 = vector.broadcast %cst_26 : f32 to vector<16x1xf32>
      %47 = arith.minimumf %46, %45 : vector<16x1xf32>
      %cst_27 = arith.constant 0.87758255 : f32
      %48 = vector.broadcast %cst_27 : f32 to vector<16x1xf32>
      %49 = arith.mulf %47, %48 : vector<16x1xf32>
      %50 = arith.mulf %47, %47 : vector<16x1xf32>
      %cst_28 = arith.constant 1.000000e+00 : f32
      %51 = vector.broadcast %cst_28 : f32 to vector<16x1xf32>
      %52 = arith.subf %51, %50 : vector<16x1xf32>
      %53 = math.sqrt %52 : vector<16x1xf32>
      %cst_29 = arith.constant 0.47942555 : f32
      %54 = vector.broadcast %cst_29 : f32 to vector<16x1xf32>
      %55 = arith.mulf %53, %54 : vector<16x1xf32>
      %56 = arith.subf %49, %55 : vector<16x1xf32>
      %cst_30 = arith.constant 6.400000e+01 : f32
      %57 = vector.broadcast %cst_30 : f32 to vector<16x1xf32>
      %58 = arith.mulf %57, %56 : vector<16x1xf32>
      %cst_31 = arith.constant 6.400000e+01 : f32
      %59 = vector.broadcast %cst_31 : f32 to vector<16x1xf32>
      %60 = arith.subf %58, %59 : vector<16x1xf32>
      %61 = math.exp %60 : vector<16x1xf32>
      %c0_32 = arith.constant 0 : index
      %c0_33 = arith.constant 0 : index
      %62 = vector.load %arg7[%c0_32, %c0_33] : memref<16x1xf32, #tpu.memory_space<vmem>>, vector<16x1xf32>
      %63 = arith.addf %61, %62 : vector<16x1xf32>
      %64 = math.log %63 : vector<16x1xf32>
      %cst_34 = arith.constant 6.400000e+01 : f32
      %65 = vector.broadcast %cst_34 : f32 to vector<16x1xf32>
      %66 = arith.addf %65, %64 : vector<16x1xf32>
      %67 = arith.subf %58, %66 : vector<16x1xf32>
      %c0_35 = arith.constant 0 : index
      %c0_36 = arith.constant 0 : index
      %68 = vector.load %arg5[%c0_35, %c0_36] : memref<16x1xf32, #tpu.memory_space<vmem>>, vector<16x1xf32>
      tpu.vector_store %arg5[%c0_35, %c0_36], %67 {strides = array<i32>} : memref<16x1xf32, #tpu.memory_space<vmem>>, vector<16x1xf32>,
    } else {
    }
    return
  }
  func.func @transform_0(%arg0: i32, %arg1: i32) -> (i32, i32) {
    %c0_i32 = arith.constant 0 : i32
    %c0_i32_0 = arith.constant 0 : i32
    return %arg0, %c0_i32 : i32, i32
  }
  func.func @transform_1(%arg0: i32, %arg1: i32) -> (i32, i32) {
    %c0_i32 = arith.constant 0 : i32
    %c0_i32_0 = arith.constant 0 : i32
    return %c0_i32, %arg1 : i32, i32
  }
  func.func @transform_2(%arg0: i32, %arg1: i32) -> (i32, i32) {
    %c0_i32 = arith.constant 0 : i32
    %c0_i32_0 = arith.constant 0 : i32
    return %arg0, %c0_i32 : i32, i32
  }
  func.func @transform_3(%arg0: i32, %arg1: i32) -> (i32, i32) {
    %c0_i32 = arith.constant 0 : i32
    %c0_i32_0 = arith.constant 0 : i32
    return %arg0, %c0_i32 : i32, i32
  }
}

</mosaic_0001>

<llo_original>
// kernel: tpu_custom_call.1
$region0: #{tpu_custom_call.1}
  #allocation0 [shape = 'u32[]', space=smem, size = 0x4, offset = 0x4, fixed_abs, tag = 'smem constant byte address 0x4 - core index']
  #allocation1 [shape = 'u32[144,128]{1,0:T(1,128)}', space=vmem, size = 0x12000, scoped, tag = 'internal scratch']
  #allocation2 [shape = 'f32[16,64]{1,0:T(8,128)}', space=vmem, size = 0x2000, scoped, tag = 'scratch operand']
  #allocation3 [shape = 'f32[16,1]{1,0:T(8,128)}', space=vmem, size = 0x2000, scoped, tag = 'scratch operand']
  #allocation4 [shape = 'f32[16,1]{1,0:T(8,128)}', space=vmem, size = 0x2000, scoped, tag = 'scratch operand']
  %s0 = inlined_call_operand.vmem [shape: f32[16,64], index: 0, kind: input, shape index: {}]
  %s1 = inlined_call_operand.hbm [shape: f32[64,1024], index: 1, kind: input, shape index: {}]
  %s2 = inlined_call_operand.vmem [shape: s32[16,1], index: 2, kind: input, shape index: {}]
  %s3 = inlined_call_operand.vmem [shape: f32[16,1], index: 3, kind: output, shape index: {}]
  %s4 = sld [smem:[#allocation0]]
  $region57: #{tpu_custom_call.1} parent=0
    _
  %s6 = ssub.s32 1, %s4
  %s7 = scalar_select 0, %s6, %s4
  $region1: #{tpu_custom_call.1} parent=0
    #allocation5 [shape = 'u8[262144]{0}', space=vmem, size = 0x40000, scoped, tag = 'input window, operand 1']
    #allocation6 [shape = 's32[2]{0}', space=sflag, size = 0x8, scoped, tag = 'scoped memory for tpu_custom_call.1']
    %8 = vsyncpa [#allocation6], 0
    %s9 = scalar_lea.sflag [#allocation6], 1
    %10 = vsyncpa %s9, 0
    loop: start=0, step=1, limit=4
    $region2: #{tpu_custom_call.1} parent=1 // loop_pre_header
      _
    $region3: #{tpu_custom_call.1} parent=1 // loop_header
      %s12 = sphi 0, %s16
      %p13 = scmp.ge.s32.totalorder %s12, 4
      %s19 = sphi 0, %s31
      %s20 = sphi 0, %s27
      %s21 = sphi 0, %s19
      %s22 = sphi 0, %s20
      %s23 = sphi 0, %s21
      %s24 = sphi 0, %s22
      %s34 = sphi 0, %s36
      %s37 = sphi 0, %s34
      %s38 = sphi 0, %s37
      %s54 = sphi 0, %s38
      %s60 = sphi 0, %s62
      %s63 = sphi 0, %s60
      %s64 = sphi 0, %s63
      %s80 = sphi 0, %s64
      %s86 = sphi 0, %s88
      %s89 = sphi 0, %s86
      %s90 = sphi 0, %s89
      %s106 = sphi 0, %s90
      %s112 = sphi 0, %s114
      %s115 = sphi 0, %s112
      %s116 = sphi 0, %s115
      %s132 = sphi 0, %s116
    $region4: #{tpu_custom_call.1} parent=1 // loop_header_branch
      %15 = sbr.rel (%p13) target = $region8
    $region5: #{tpu_custom_call.1} parent=1 // loop_body
      %s17 = ssub.s32 %s12, 1
      %s18 = ssub.s32 %s12, 2
      %s25 = sadd.s32 1, %s20
      %p26 = scmp.ge.s32.totalorder %s25, 2
      %s27 = scalar_select %p26, 0, %s25
      %s28 = sadd.s32 1, %s19
      %s29 = scalar_select %p26, %s28, %s19
      %p30 = scmp.ge.s32.totalorder %s29, 1
      %s31 = scalar_select %p30, 0, %s29
      %s32 = ssub.s32 %s19, %s31
      %p33 = scmp.eq.s32.totalorder %s32, 0
      %s35 = sadd.s32 %s34, 1
      %s36 = scalar_select %p33, %s34, %s35
      %p39 = pneg %p33
      %p40 = scmp.eq.s32.totalorder %s12, 1
      %p41 = por %p39, %p40
      %p42 = scmp.ne.s32.totalorder %s34, %s37
      %p43 = scmp.eq.s32.totalorder %s12, 0
      %p44 = por %p42, %p43
      %p45 = scmp.ne.s32.totalorder %s34, %s37
      %p46 = scmp.eq.s32.totalorder %s17, 1
      %p47 = por %p45, %p46
      %p48 = scmp.ne.s32.totalorder %s37, %s38
      %p49 = scmp.eq.s32.totalorder %s17, 0
      %p50 = por %p48, %p49
      %p51 = scmp.ne.s32.totalorder %s37, %s38
      %p52 = scmp.eq.s32.totalorder %s18, 1
      %p53 = por %p51, %p52
      %p55 = scmp.ne.s32.totalorder %s38, %s54
      %p56 = scmp.eq.s32.totalorder %s18, 0
      %p57 = por %p55, %p56
      %s58 = ssub.s32 %s20, %s27
      %p59 = scmp.eq.s32.totalorder %s58, 0
      %s61 = sadd.s32 %s60, 1
      %s62 = scalar_select %p59, %s60, %s61
      %p65 = pneg %p59
      %p66 = scmp.eq.s32.totalorder %s12, 1
      %p67 = por %p65, %p66
      %p68 = scmp.ne.s32.totalorder %s60, %s63
      %p69 = scmp.eq.s32.totalorder %s12, 0
      %p70 = por %p68, %p69
      %p71 = scmp.ne.s32.totalorder %s60, %s63
      %p72 = scmp.eq.s32.totalorder %s17, 1
      %p73 = por %p71, %p72
      %p74 = scmp.ne.s32.totalorder %s63, %s64
      %p75 = scmp.eq.s32.totalorder %s17, 0
      %p76 = por %p74, %p75
      %p77 = scmp.ne.s32.totalorder %s63, %s64
      %p78 = scmp.eq.s32.totalorder %s18, 1
      %p79 = por %p77, %p78
      %p81 = scmp.ne.s32.totalorder %s64, %s80
      %p82 = scmp.eq.s32.totalorder %s18, 0
      %p83 = por %p81, %p82
      %s84 = ssub.s32 %s19, %s31
      %p85 = scmp.eq.s32.totalorder %s84, 0
      %s87 = sadd.s32 %s86, 1
      %s88 = scalar_select %p85, %s86, %s87
      %p91 = pneg %p85
      %p92 = scmp.eq.s32.totalorder %s12, 1
      %p93 = por %p91, %p92
      %p94 = scmp.ne.s32.totalorder %s86, %s89
      %p95 = scmp.eq.s32.totalorder %s12, 0
      %p96 = por %p94, %p95
      %p97 = scmp.ne.s32.totalorder %s86, %s89
      %p98 = scmp.eq.s32.totalorder %s17, 1
      %p99 = por %p97, %p98
      %p100 = scmp.ne.s32.totalorder %s89, %s90
      %p101 = scmp.eq.s32.totalorder %s17, 0
      %p102 = por %p100, %p101
      %p103 = scmp.ne.s32.totalorder %s89, %s90
      %p104 = scmp.eq.s32.totalorder %s18, 1
      %p105 = por %p103, %p104
      %p107 = scmp.ne.s32.totalorder %s90, %s106
      %p108 = scmp.eq.s32.totalorder %s18, 0
      %p109 = por %p107, %p108
      %s110 = ssub.s32 %s19, %s31
      %p111 = scmp.eq.s32.totalorder %s110, 0
      %s113 = sadd.s32 %s112, 1
      %s114 = scalar_select %p111, %s112, %s113
      %p117 = pneg %p111
      %p118 = scmp.eq.s32.totalorder %s12, 1
      %p119 = por %p117, %p118
      %p120 = scmp.ne.s32.totalorder %s112, %s115
      %p121 = scmp.eq.s32.totalorder %s12, 0
      %p122 = por %p120, %p121
      %p123 = scmp.ne.s32.totalorder %s112, %s115
      %p124 = scmp.eq.s32.totalorder %s17, 1
      %p125 = por %p123, %p124
      %p126 = scmp.ne.s32.totalorder %s115, %s116
      %p127 = scmp.eq.s32.totalorder %s17, 0
      %p128 = por %p126, %p127
      %p129 = scmp.ne.s32.totalorder %s115, %s116
      %p130 = scmp.eq.s32.totalorder %s18, 1
      %p131 = por %p129, %p130
      %p133 = scmp.ne.s32.totalorder %s116, %s132
      %p134 = scmp.eq.s32.totalorder %s18, 0
      %p135 = por %p133, %p134
      %p136 = scmp.le.s32.totalorder 1, %s12
      %p137 = scmp.lt.s32.totalorder %s12, 3
      %p138 = pnand %p136, %p137
      %p139 = pneg %p138
      // Predicated region
      $region9: #{tpu_custom_call.1} parent=5 // pred_check
        _
      $region10: #{tpu_custom_call.1} parent=5 // pred_check_branch
        %141 = sbr.rel (%p138) target = $region12
      $region11: #{tpu_custom_call.1} parent=5 // pred_region
        %s142 = ssub.s32 %s12, 1
        // Predicated region
        $region13: #{tpu_custom_call.1} parent=11 // pred_check
          %p143 = pneg %p50
        $region14: #{tpu_custom_call.1} parent=11 // pred_check_branch
          %145 = sbr.rel (%p143) target = $region16
        $region15: #{tpu_custom_call.1} parent=11 // pred_region
          %s146 = smul.u32 2, %s21
          %p147 = scmp.lt.s32.totalorder %s146, 1
          %s148 = scalar_select %p147, %s146, 1
          %s149 = smul.addr %s148, 8
          %s150 = scalar_lea.vmem %s0, %s149
          %s151 = smul.u32 2, %s21
        $region16: #{tpu_custom_call.1} parent=11 // pred_fallthru
          _
        // Predicated region
        $region17: #{tpu_custom_call.1} parent=11 // pred_check
          %p152 = pneg %p102
        $region18: #{tpu_custom_call.1} parent=11 // pred_check_branch
          %154 = sbr.rel (%p152) target = $region20
        $region19: #{tpu_custom_call.1} parent=11 // pred_region
          %s155 = smul.u32 2, %s21
          %p156 = scmp.lt.s32.totalorder %s155, 1
          %s157 = scalar_select %p156, %s155, 1
          %s158 = smul.addr %s157, 8
          %s159 = scalar_lea.vmem %s2, %s158
          %s160 = smul.u32 2, %s21
        $region20: #{tpu_custom_call.1} parent=11 // pred_fallthru
          _
      $region12: #{tpu_custom_call.1} parent=5 // pred_fallthru
        _
      %p161 = scmp.lt.s32.totalorder %s12, 2
      // Predicated region
      $region21: #{tpu_custom_call.1} parent=5 // pred_check
        %p162 = pneg %p161
      $region22: #{tpu_custom_call.1} parent=5 // pred_check_branch
        %164 = sbr.rel (%p162) target = $region24
      $region23: #{tpu_custom_call.1} parent=5 // pred_region
        // Predicated region
        $region25: #{tpu_custom_call.1} parent=23 // pred_check
          %p165 = pneg %p70
        $region26: #{tpu_custom_call.1} parent=23 // pred_check_branch
          %167 = sbr.rel (%p165) target = $region28
        $region27: #{tpu_custom_call.1} parent=23 // pred_region
          %s168 = sand.u32 %s60, 1
          %s169 = scalar_lea.sflag [#allocation6], %s168
          %s170 = sand.u32 %s60, 1
          %s171 = smul.addr %s170, 256
          %s172 = scalar_lea.vmem [#allocation5], %s171
          %s173 = smul.u32 4, %s20
          %s175 = ssub.s32 4096, 4096
          %176 = vsyncadd %s169, %s175
          %s177 = smul.addr %s173, 128
          %s178 = scalar_lea.hbm %s1, %s177
          %s179 = sshll.u32 %s172, 4
          %s180 = int_to_ptr.vmem [resolvable:$true] %s179
          %185 = dma.hbm_to_vmem [thread:$0]  %s178, 4096, %s180, %s169, 1024, 512, 32
        $region28: #{tpu_custom_call.1} parent=23 // pred_fallthru
          _
      $region24: #{tpu_custom_call.1} parent=5 // pred_fallthru
        _
      %p186 = scmp.le.s32.totalorder 1, %s12
      %p187 = scmp.lt.s32.totalorder %s12, 3
      %p188 = pnand %p186, %p187
      %p189 = pneg %p188
      // Predicated region
      $region29: #{tpu_custom_call.1} parent=5 // pred_check
        _
      $region30: #{tpu_custom_call.1} parent=5 // pred_check_branch
        %191 = sbr.rel (%p188) target = $region32
      $region31: #{tpu_custom_call.1} parent=5 // pred_region
        %s192 = ssub.s32 %s12, 1
        %s193 = sand.u32 %s63, 1
        %s194 = scalar_lea.sflag [#allocation6], %s193
        %s195 = sand.u32 %s63, 1
        %s196 = smul.addr %s195, 256
        %s197 = scalar_lea.vmem [#allocation5], %s196
        // Predicated region
        $region33: #{tpu_custom_call.1} parent=31 // pred_check
          %p198 = pneg %p76
        $region34: #{tpu_custom_call.1} parent=31 // pred_check_branch
          %200 = sbr.rel (%p198) target = $region36
        $region35: #{tpu_custom_call.1} parent=31 // pred_region
          %201 = dma.done %s194, 4096
        $region36: #{tpu_custom_call.1} parent=31 // pred_fallthru
          _
        %s202 = smul.u32 2, %s21
        %p203 = scmp.lt.s32.totalorder %s202, 1
        %s204 = scalar_select %p203, %s202, 1
        %s205 = smul.addr %s204, 8
        %s206 = scalar_lea.vmem %s0, %s205
        %p207 = pneg %p50
        %p208 = pneg %p47
        %s209 = sand.u32 %s63, 1
        %s210 = scalar_lea.sflag [#allocation6], %s209
        %s211 = sand.u32 %s63, 1
        %s212 = smul.addr %s211, 256
        %s213 = scalar_lea.vmem [#allocation5], %s212
        %p214 = pneg %p76
        %p215 = pneg %p73
        %s216 = smul.u32 2, %s21
        %p217 = scmp.lt.s32.totalorder %s216, 1
        %s218 = scalar_select %p217, %s216, 1
        %s219 = smul.addr %s218, 8
        %s220 = scalar_lea.vmem %s2, %s219
        %p221 = pneg %p102
        %p222 = pneg %p99
        %p223 = pneg %p128
        %p224 = pneg %p125
        %s225 = smul.u32 2, %s21
        %p226 = scmp.lt.s32.totalorder %s225, 1
        %s227 = scalar_select %p226, %s225, 1
        %s228 = smul.addr %s227, 8
        %s229 = scalar_lea.vmem %s3, %s228
        %s230 = smul.u32 2, %s21
        %p231 = scmp.lt.s32.totalorder %s230, 1
        %s232 = scalar_select %p231, %s230, 1
        %s233 = smul.addr %s232, 8
        %s234 = scalar_lea.vmem %s0, %s233
        %s235 = smul.u32 2, %s21
        %s236 = smul.u32 4, %s22
        %s237 = smul.u32 2, %s21
        %p238 = scmp.lt.s32.totalorder %s237, 1
        %s239 = scalar_select %p238, %s237, 1
        %s240 = smul.addr %s239, 8
        %s241 = scalar_lea.vmem %s2, %s240
        %s242 = smul.u32 2, %s21
        %s243 = smul.u32 2, %s21
        %p244 = scmp.lt.s32.totalorder %s243, 1
        %s245 = scalar_select %p244, %s243, 1
        %s246 = smul.addr %s245, 8
        %s247 = scalar_lea.vmem %s3, %s246
        %s248 = smul.u32 2, %s21
        %p249 = scmp.eq.s32.totalorder %s22, 0
        // Predicated region
        $region37: #{tpu_custom_call.1} parent=31 // pred_check
          %p250 = pneg %p249
        $region38: #{tpu_custom_call.1} parent=31 // pred_check_branch
          %252 = sbr.rel (%p250) target = $region40
        $region39: #{tpu_custom_call.1} parent=31 // pred_region
          %v253 = vld [vmem:[%s234] sm:$0xff]
          %v254 = vld [vmem:[%s234 + $0x8] sm:$0xff]
          %v255 = vmul.f32 %v253, %v253
          %v256 = vmul.f32 %v254, %v254
          %vm257 = vcmask 523264
          %v258 = vsel %vm257, %v255, 0.0
          %259 = vadd.xlane.f32.xlu0 %v258
          %v260 = vpop.xlane.xlu0 %259
          %v261 = vsel %vm257, %v256, 0.0
          %262 = vadd.xlane.f32.xlu0 %v261
          %v263 = vpop.xlane.xlu0 %262
          %v264 = vmax.f32 %v260, 1e-24
          %v265 = vmax.f32 %v263, 1e-24
          %v266 = vrsqrt.pop %v264
          %v267 = vrsqrt.pop %v265
          %v268 = vmul.f32 %v253, %v266
          %v269 = vmul.f32 %v254, %v267
          %270 = vst.msk [vmem:[#allocation2] sm:$0xff] %vm257, %v268
          %271 = vst.msk [vmem:[#allocation2 + $0x8] sm:$0xff] %vm257, %v269
          %vm272 = vcmask 7168
          %273 = vst.msk [vmem:[#allocation3] sm:$0xff] %vm272, 0.0
          %274 = vst.msk [vmem:[#allocation3 + $0x8] sm:$0xff] %vm272, 0.0
          %275 = vst.msk [vmem:[#allocation4] sm:$0xff] %vm272, 0.0
          %276 = vst.msk [vmem:[#allocation4 + $0x8] sm:$0xff] %vm272, 0.0
        $region40: #{tpu_custom_call.1} parent=31 // pred_fallthru
          _
        %v277 = vld [vmem:[%s197] sm:$0xff]
        %v278 = vld [vmem:[%s197 + $0x8] sm:$0xff]
        %v279 = vld [vmem:[%s197 + $0x10] sm:$0xff]
        %v280 = vld [vmem:[%s197 + $0x18] sm:$0xff]
        %v281 = vld [vmem:[%s197 + $0x20] sm:$0xff]
        %v282 = vld [vmem:[%s197 + $0x28] sm:$0xff]
        %v283 = vld [vmem:[%s197 + $0x30] sm:$0xff]
        %v284 = vld [vmem:[%s197 + $0x38] sm:$0xff]
        %v285 = vld [vmem:[%s197 + $0x40] sm:$0xff]
        %v286 = vld [vmem:[%s197 + $0x48] sm:$0xff]
        %v287 = vld [vmem:[%s197 + $0x50] sm:$0xff]
        %v288 = vld [vmem:[%s197 + $0x58] sm:$0xff]
        %v289 = vld [vmem:[%s197 + $0x60] sm:$0xff]
        %v290 = vld [vmem:[%s197 + $0x68] sm:$0xff]
        %v291 = vld [vmem:[%s197 + $0x70] sm:$0xff]
        %v292 = vld [vmem:[%s197 + $0x78] sm:$0xff]
        %v293 = vld [vmem:[%s197 + $0x80] sm:$0xff]
        %v294 = vld [vmem:[%s197 + $0x88] sm:$0xff]
        %v295 = vld [vmem:[%s197 + $0x90] sm:$0xff]
        %v296 = vld [vmem:[%s197 + $0x98] sm:$0xff]
        %v297 = vld [vmem:[%s197 + $0xa0] sm:$0xff]
        %v298 = vld [vmem:[%s197 + $0xa8] sm:$0xff]
        %v299 = vld [vmem:[%s197 + $0xb0] sm:$0xff]
        %v300 = vld [vmem:[%s197 + $0xb8] sm:$0xff]
        %v301 = vld [vmem:[%s197 + $0xc0] sm:$0xff]
        %v302 = vld [vmem:[%s197 + $0xc8] sm:$0xff]
        %v303 = vld [vmem:[%s197 + $0xd0] sm:$0xff]
        %v304 = vld [vmem:[%s197 + $0xd8] sm:$0xff]
        %v305 = vld [vmem:[%s197 + $0xe0] sm:$0xff]
        %v306 = vld [vmem:[%s197 + $0xe8] sm:$0xff]
        %v307 = vld [vmem:[%s197 + $0xf0] sm:$0xff]
        %v308 = vld [vmem:[%s197 + $0xf8] sm:$0xff]
        %v309 = vmul.f32 %v277, %v277
        %v310 = vmul.f32 %v278, %v278
        %v311 = vmul.f32 %v279, %v279
        %v312 = vmul.f32 %v280, %v280
        %v313 = vmul.f32 %v281, %v281
        %v314 = vmul.f32 %v282, %v282
        %v315 = vmul.f32 %v283, %v283
        %v316 = vmul.f32 %v284, %v284
        %v317 = vmul.f32 %v285, %v285
        %v318 = vmul.f32 %v286, %v286
        %v319 = vmul.f32 %v287, %v287
        %v320 = vmul.f32 %v288, %v288
        %v321 = vmul.f32 %v289, %v289
        %v322 = vmul.f32 %v290, %v290
        %v323 = vmul.f32 %v291, %v291
        %v324 = vmul.f32 %v292, %v292
        %v325 = vmul.f32 %v293, %v293
        %v326 = vmul.f32 %v294, %v294
        %v327 = vmul.f32 %v295, %v295
        %v328 = vmul.f32 %v296, %v296
        %v329 = vmul.f32 %v297, %v297
        %v330 = vmul.f32 %v298, %v298
        %v331 = vmul.f32 %v299, %v299
        %v332 = vmul.f32 %v300, %v300
        %v333 = vmul.f32 %v301, %v301
        %v334 = vmul.f32 %v302, %v302
        %v335 = vmul.f32 %v303, %v303
        %v336 = vmul.f32 %v304, %v304
        %v337 = vmul.f32 %v305, %v305
        %v338 = vmul.f32 %v306, %v306
        %v339 = vmul.f32 %v307, %v307
        %v340 = vmul.f32 %v308, %v308
        %v341 = vadd.f32 %v309, %v313
        %v342 = vadd.f32 %v341, %v317
        %v343 = vadd.f32 %v342, %v321
        %v344 = vadd.f32 %v343, %v325
        %v345 = vadd.f32 %v344, %v329
        %v346 = vadd.f32 %v345, %v333
        %v347 = vadd.f32 %v346, %v337
        %v348 = vrot.slane %v347, 4
        %v349 = vadd.f32 %v347, %v348
        %v350 = vrot.slane %v349, 2
        %v351 = vadd.f32 %v349, %v350
        %v352 = vrot.slane %v351, 1
        %v353 = vadd.f32 %v351, %v352
        %v354 = vadd.f32 %v310, %v314
        %v355 = vadd.f32 %v354, %v318
        %v356 = vadd.f32 %v355, %v322
        %v357 = vadd.f32 %v356, %v326
        %v358 = vadd.f32 %v357, %v330
        %v359 = vadd.f32 %v358, %v334
        %v360 = vadd.f32 %v359, %v338
        %v361 = vrot.slane %v360, 4
        %v362 = vadd.f32 %v360, %v361
        %v363 = vrot.slane %v362, 2
        %v364 = vadd.f32 %v362, %v363
        %v365 = vrot.slane %v364, 1
        %v366 = vadd.f32 %v364, %v365
        %v367 = vadd.f32 %v311, %v315
        %v368 = vadd.f32 %v367, %v319
        %v369 = vadd.f32 %v368, %v323
        %v370 = vadd.f32 %v369, %v327
        %v371 = vadd.f32 %v370, %v331
        %v372 = vadd.f32 %v371, %v335
        %v373 = vadd.f32 %v372, %v339
        %v374 = vrot.slane %v373, 4
        %v375 = vadd.f32 %v373, %v374
        %v376 = vrot.slane %v375, 2
        %v377 = vadd.f32 %v375, %v376
        %v378 = vrot.slane %v377, 1
        %v379 = vadd.f32 %v377, %v378
        %v380 = vadd.f32 %v312, %v316
        %v381 = vadd.f32 %v380, %v320
        %v382 = vadd.f32 %v381, %v324
        %v383 = vadd.f32 %v382, %v328
        %v384 = vadd.f32 %v383, %v332
        %v385 = vadd.f32 %v384, %v336
        %v386 = vadd.f32 %v385, %v340
        %v387 = vrot.slane %v386, 4
        %v388 = vadd.f32 %v386, %v387
        %v389 = vrot.slane %v388, 2
        %v390 = vadd.f32 %v388, %v389
        %v391 = vrot.slane %v390, 1
        %v392 = vadd.f32 %v390, %v391
        %v393 = vmax.f32 %v353, 1e-24
        %v394 = vmax.f32 %v366, 1e-24
        %v395 = vmax.f32 %v379, 1e-24
        %v396 = vmax.f32 %v392, 1e-24
        %v397 = vrsqrt.pop %v393
        %v398 = vrsqrt.pop %v394
        %v399 = vrsqrt.pop %v395
        %v400 = vrsqrt.pop %v396
        %v401 = vmul.f32 %v277, %v397
        %v402 = vmul.f32 %v278, %v398
        %v403 = vmul.f32 %v279, %v399
        %v404 = vmul.f32 %v280, %v400
        %v405 = vmul.f32 %v281, %v397
        %v406 = vmul.f32 %v282, %v398
        %v407 = vmul.f32 %v283, %v399
        %v408 = vmul.f32 %v284, %v400
        %v409 = vmul.f32 %v285, %v397
        %v410 = vmul.f32 %v286, %v398
        %v411 = vmul.f32 %v287, %v399
        %v412 = vmul.f32 %v288, %v400
        %v413 = vmul.f32 %v289, %v397
        %v414 = vmul.f32 %v290, %v398
        %v415 = vmul.f32 %v291, %v399
        %v416 = vmul.f32 %v292, %v400
        %v417 = vmul.f32 %v293, %v397
        %v418 = vmul.f32 %v294, %v398
        %v419 = vmul.f32 %v295, %v399
        %v420 = vmul.f32 %v296, %v400
        %v421 = vmul.f32 %v297, %v397
        %v422 = vmul.f32 %v298, %v398
        %v423 = vmul.f32 %v299, %v399
        %v424 = vmul.f32 %v300, %v400
        %v425 = vmul.f32 %v301, %v397
        %v426 = vmul.f32 %v302, %v398
        %v427 = vmul.f32 %v303, %v399
        %v428 = vmul.f32 %v304, %v400
        %v429 = vmul.f32 %v305, %v397
        %v430 = vmul.f32 %v306, %v398
        %v431 = vmul.f32 %v307, %v399
        %v432 = vmul.f32 %v308, %v400
        %v433 = vld [vmem:[#allocation2] sm:$0xff]
        %v434 = vld [vmem:[#allocation2 + $0x8] sm:$0xff]
        %vm435 = vcmask 523264
        %v437 = vsel %vm435, %v433, 0
        %v440 = vsel %vm435, %v434, 0
        %442 = vmatprep.subr.mxu0 %v402
        %443 = vmatpush1.msra.mxu0 %v401
        %444 = vmatprep.subr.mxu0 %v406
        %445 = vmatpush1.msra.mxu0 %v405
        %446 = vmatprep.subr.mxu0 %v410
        %447 = vmatpush1.msra.mxu0 %v409
        %448 = vmatprep.subr.mxu0 %v414
        %449 = vmatpush1.msra.mxu0 %v413
        %450 = vmatprep.subr.mxu0 %v418
        %451 = vmatpush1.msra.mxu0 %v417
        %452 = vmatprep.subr.mxu0 %v422
        %453 = vmatpush1.msra.mxu0 %v421
        %454 = vmatprep.subr.mxu0 %v426
        %455 = vmatpush1.msra.mxu0 %v425
        %456 = vmatprep.subr.mxu0 %v430
        %457 = vmatpush1.msra.mxu0 %v429
        %458 = vmatprep.subr.mxu0 0.0
        %459 = vmatpush1.msra.mxu0 0.0
        %460 = vmatprep.subr.mxu0 0.0
        %461 = vmatpush1.msra.mxu0 0.0
        %462 = vmatprep.subr.mxu0 0.0
        %463 = vmatpush1.msra.mxu0 0.0
        %464 = vmatprep.subr.mxu0 0.0
        %465 = vmatpush1.msra.mxu0 0.0
        %466 = vmatprep.subr.mxu0 0.0
        %467 = vmatpush1.msra.mxu0 0.0
        %468 = vmatprep.subr.mxu0 0.0
        %469 = vmatpush1.msra.mxu0 0.0
        %470 = vmatprep.subr.mxu0 0.0
        %471 = vmatpush1.msra.mxu0 0.0
        %472 = vmatprep.subr.mxu0 0.0
        %473 = vmatpush1.msra.mxu0 0.0
        %474 = vmatprep.subr.mxu0 0.0
        %475 = vmatpush1.msra.mxu0 0.0
        %476 = vmatprep.subr.mxu0 0.0
        %477 = vmatpush1.msra.mxu0 0.0
        %478 = vmatprep.subr.mxu0 0.0
        %479 = vmatpush1.msra.mxu0 0.0
        %480 = vmatprep.subr.mxu0 0.0
        %481 = vmatpush1.msra.mxu0 0.0
        %482 = vmatprep.subr.mxu0 0.0
        %483 = vmatpush1.msra.mxu0 0.0
        %484 = vmatprep.subr.mxu0 0.0
        %485 = vmatpush1.msra.mxu0 0.0
        %486 = vmatprep.subr.mxu0 0.0
        %487 = vmatpush1.msra.mxu0 0.0
        %488 = vmatprep.subr.mxu0 0.0
        %489 = vmatpush1.msra.mxu0 0.0
        %490 = vmatprep.subr.mxu0 0.0
        %491 = vmatpush1.msra.mxu0 0.0
        %492 = vmatprep.subr.mxu0 0.0
        %493 = vmatpush1.msra.mxu0 0.0
        %494 = vmatprep.subr.mxu0 0.0
        %495 = vmatpush1.msra.mxu0 0.0
        %496 = vmatprep.subr.mxu0 0.0
        %497 = vmatpush1.msra.mxu0 0.0
        %498 = vmatprep.subr.mxu0 0.0
        %499 = vmatpush1.msra.mxu0 0.0
        %500 = vmatprep.subr.mxu0 0.0
        %501 = vmatpush1.msra.mxu0 0.0
        %502 = vmatprep.subr.mxu0 0.0
        %503 = vmatpush1.msra.mxu0 0.0
        %504 = vmatprep.subr.mxu0 0.0
        %505 = vmatpush1.msra.mxu0 0.0
        %506 = vmatprep.mubr.f32.mxu0 0.0
        %507 = vmatmul.mubr.f32.gmra.mrb[0].mxu0 %v437
        %v508 = vpop.f32.mrb[0].mxu0
        %v509 = vadd.f32 0.0, %v508
        %v510 = vpop.f32.mrb[0].mxu0
        %v511 = vadd.f32 0.0, %v510
        %512 = vmatprep.mubr.f32.mxu0 0.0
        %513 = vmatmul.mubr.f32.gmra.mrb[0].mxu0 %v440
        %v514 = vpop.f32.mrb[0].mxu0
        %v515 = vadd.f32 0.0, %v514
        %v516 = vpop.f32.mrb[0].mxu0
        %v517 = vadd.f32 0.0, %v516
        %518 = vdwg.mxu0
        %519 = vmatprep.subr.mxu0 %v404
        %520 = vmatpush1.msra.mxu0 %v403
        %521 = vmatprep.subr.mxu0 %v408
        %522 = vmatpush1.msra.mxu0 %v407
        %523 = vmatprep.subr.mxu0 %v412
        %524 = vmatpush1.msra.mxu0 %v411
        %525 = vmatprep.subr.mxu0 %v416
        %526 = vmatpush1.msra.mxu0 %v415
        %527 = vmatprep.subr.mxu0 %v420
        %528 = vmatpush1.msra.mxu0 %v419
        %529 = vmatprep.subr.mxu0 %v424
        %530 = vmatpush1.msra.mxu0 %v423
        %531 = vmatprep.subr.mxu0 %v428
        %532 = vmatpush1.msra.mxu0 %v427
        %533 = vmatprep.subr.mxu0 %v432
        %534 = vmatpush1.msra.mxu0 %v431
        %535 = vmatprep.subr.mxu0 0.0
        %536 = vmatpush1.msra.mxu0 0.0
        %537 = vmatprep.subr.mxu0 0.0
        %538 = vmatpush1.msra.mxu0 0.0
        %539 = vmatprep.subr.mxu0 0.0
        %540 = vmatpush1.msra.mxu0 0.0
        %541 = vmatprep.subr.mxu0 0.0
        %542 = vmatpush1.msra.mxu0 0.0
        %543 = vmatprep.subr.mxu0 0.0
        %544 = vmatpush1.msra.mxu0 0.0
        %545 = vmatprep.subr.mxu0 0.0
        %546 = vmatpush1.msra.mxu0 0.0
        %547 = vmatprep.subr.mxu0 0.0
        %548 = vmatpush1.msra.mxu0 0.0
        %549 = vmatprep.subr.mxu0 0.0
        %550 = vmatpush1.msra.mxu0 0.0
        %551 = vmatprep.subr.mxu0 0.0
        %552 = vmatpush1.msra.mxu0 0.0
        %553 = vmatprep.subr.mxu0 0.0
        %554 = vmatpush1.msra.mxu0 0.0
        %555 = vmatprep.subr.mxu0 0.0
        %556 = vmatpush1.msra.mxu0 0.0
        %557 = vmatprep.subr.mxu0 0.0
        %558 = vmatpush1.msra.mxu0 0.0
        %559 = vmatprep.subr.mxu0 0.0
        %560 = vmatpush1.msra.mxu0 0.0
        %561 = vmatprep.subr.mxu0 0.0
        %562 = vmatpush1.msra.mxu0 0.0
        %563 = vmatprep.subr.mxu0 0.0
        %564 = vmatpush1.msra.mxu0 0.0
        %565 = vmatprep.subr.mxu0 0.0
        %566 = vmatpush1.msra.mxu0 0.0
        %567 = vmatprep.subr.mxu0 0.0
        %568 = vmatpush1.msra.mxu0 0.0
        %569 = vmatprep.subr.mxu0 0.0
        %570 = vmatpush1.msra.mxu0 0.0
        %571 = vmatprep.subr.mxu0 0.0
        %572 = vmatpush1.msra.mxu0 0.0
        %573 = vmatprep.subr.mxu0 0.0
        %574 = vmatpush1.msra.mxu0 0.0
        %575 = vmatprep.subr.mxu0 0.0
        %576 = vmatpush1.msra.mxu0 0.0
        %577 = vmatprep.subr.mxu0 0.0
        %578 = vmatpush1.msra.mxu0 0.0
        %579 = vmatprep.subr.mxu0 0.0
        %580 = vmatpush1.msra.mxu0 0.0
        %581 = vmatprep.subr.mxu0 0.0
        %582 = vmatpush1.msra.mxu0 0.0
        %583 = vmatprep.mubr.f32.mxu0 0.0
        %584 = vmatmul.mubr.f32.gmra.mrb[0].mxu0 %v437
        %v585 = vpop.f32.mrb[0].mxu0
        %v586 = vadd.f32 0.0, %v585
        %v587 = vpop.f32.mrb[0].mxu0
        %v588 = vadd.f32 0.0, %v587
        %589 = vmatprep.mubr.f32.mxu0 0.0
        %590 = vmatmul.mubr.f32.gmra.mrb[0].mxu0 %v440
        %v591 = vpop.f32.mrb[0].mxu0
        %v592 = vadd.f32 0.0, %v591
        %v593 = vpop.f32.mrb[0].mxu0
        %v594 = vadd.f32 0.0, %v593
        %595 = vdwg.mxu0
        %v596 = vld [vmem:[%s241] sm:$0xff]
        %v597 = vld [vmem:[%s241 + $0x8] sm:$0xff]
        %s598 = smul.u32 %s22, 512
        %v599 = vlaneseq
        %v600 = vand.u32 %v599, 127
        %v601 = vadd.s32 %v600, 128
        %v602 = vadd.s32 %v600, 256
        %v603 = vadd.s32 %v600, 384
        %v604 = vstv %s598
        %v605 = vadd.s32 %v604, %v600
        %v606 = vadd.s32 %v604, %v601
        %v607 = vadd.s32 %v604, %v602
        %v608 = vadd.s32 %v604, %v603
        %609 = vset.pattern.permute.xlu0 0
        %610 = vperm.xlu0 %609, %v596
        %v611 = vpop.permute.xlu0 %610
        %612 = vset.pattern.permute.xlu0 0
        %613 = vperm.xlu0 %612, %v597
        %v614 = vpop.permute.xlu0 %613
        %vm615 = vcmp.eq.s32.totalorder %v605, %v611
        %vm616 = vcmp.eq.s32.totalorder %v606, %v611
        %vm617 = vcmp.eq.s32.totalorder %v607, %v611
        %vm618 = vcmp.eq.s32.totalorder %v608, %v611
        %vm619 = vcmp.eq.s32.totalorder %v605, %v614
        %vm620 = vcmp.eq.s32.totalorder %v606, %v614
        %vm621 = vcmp.eq.s32.totalorder %v607, %v614
        %vm622 = vcmp.eq.s32.totalorder %v608, %v614
        %v623 = vmul.f32 %v509, 64.0
        %v624 = vmul.f32 %v511, 64.0
        %v625 = vmul.f32 %v586, 64.0
        %v626 = vmul.f32 %v588, 64.0
        %v627 = vmul.f32 %v515, 64.0
        %v628 = vmul.f32 %v517, 64.0
        %v629 = vmul.f32 %v592, 64.0
        %v630 = vmul.f32 %v594, 64.0
        %v631 = vsub.f32 %v623, 64.0
        %v632 = vsub.f32 %v624, 64.0
        %v633 = vsub.f32 %v625, 64.0
        %v634 = vsub.f32 %v626, 64.0
        %v635 = vsub.f32 %v627, 64.0
        %v636 = vsub.f32 %v628, 64.0
        %v637 = vsub.f32 %v629, 64.0
        %v638 = vsub.f32 %v630, 64.0
        %v639 = vmul.f32 %v631, 1.442695
        %v640 = vpow.pop %v639
        %v641 = vmul.f32 %v632, 1.442695
        %v642 = vpow.pop %v641
        %v643 = vmul.f32 %v633, 1.442695
        %v644 = vpow.pop %v643
        %v645 = vmul.f32 %v634, 1.442695
        %v646 = vpow.pop %v645
        %v647 = vmul.f32 %v635, 1.442695
        %v648 = vpow.pop %v647
        %v649 = vmul.f32 %v636, 1.442695
        %v650 = vpow.pop %v649
        %v651 = vmul.f32 %v637, 1.442695
        %v652 = vpow.pop %v651
        %v653 = vmul.f32 %v638, 1.442695
        %v654 = vpow.pop %v653
        %v655 = vld [vmem:[#allocation3] sm:$0xff]
        %v656 = vld [vmem:[#allocation3 + $0x8] sm:$0xff]
        %v657 = vsel %vm615, 0.0, %v640
        %v658 = vsel %vm616, 0.0, %v642
        %v659 = vsel %vm617, 0.0, %v644
        %v660 = vsel %vm618, 0.0, %v646
        %v661 = vsel %vm619, 0.0, %v648
        %v662 = vsel %vm620, 0.0, %v650
        %v663 = vsel %vm621, 0.0, %v652
        %v664 = vsel %vm622, 0.0, %v654
        %v665 = vadd.f32 %v657, %v658
        %v666 = vadd.f32 %v665, %v659
        %v667 = vadd.f32 %v666, %v660
        %668 = vadd.xlane.f32.xlu0 %v667
        %v669 = vpop.xlane.xlu0 %668
        %v670 = vadd.f32 %v661, %v662
        %v671 = vadd.f32 %v670, %v663
        %v672 = vadd.f32 %v671, %v664
        %673 = vadd.xlane.f32.xlu0 %v672
        %v674 = vpop.xlane.xlu0 %673
        %v675 = vadd.f32 %v655, %v669
        %v676 = vadd.f32 %v656, %v674
        %vm677 = vcmask 7168
        %678 = vst.msk [vmem:[#allocation3] sm:$0xff] %vm677, %v675
        %679 = vst.msk [vmem:[#allocation3 + $0x8] sm:$0xff] %vm677, %v676
        %v680 = vld [vmem:[#allocation4] sm:$0xff]
        %v681 = vld [vmem:[#allocation4 + $0x8] sm:$0xff]
        %v682 = vsel %vm615, %v509, 0.0
        %v683 = vsel %vm616, %v511, 0.0
        %v684 = vsel %vm617, %v586, 0.0
        %v685 = vsel %vm618, %v588, 0.0
        %v686 = vsel %vm619, %v515, 0.0
        %v687 = vsel %vm620, %v517, 0.0
        %v688 = vsel %vm621, %v592, 0.0
        %v689 = vsel %vm622, %v594, 0.0
        %v690 = vadd.f32 %v682, %v683
        %v691 = vadd.f32 %v690, %v684
        %v692 = vadd.f32 %v691, %v685
        %693 = vadd.xlane.f32.xlu0 %v692
        %v694 = vpop.xlane.xlu0 %693
        %v695 = vadd.f32 %v686, %v687
        %v696 = vadd.f32 %v695, %v688
        %v697 = vadd.f32 %v696, %v689
        %698 = vadd.xlane.f32.xlu0 %v697
        %v699 = vpop.xlane.xlu0 %698
        %v700 = vadd.f32 %v680, %v694
        %v701 = vadd.f32 %v681, %v699
        %702 = vst.msk [vmem:[#allocation4] sm:$0xff] %vm677, %v700
        %703 = vst.msk [vmem:[#allocation4 + $0x8] sm:$0xff] %vm677, %v701
        %p704 = scmp.eq.s32.totalorder %s22, 1
        // Predicated region
        $region41: #{tpu_custom_call.1} parent=31 // pred_check
          %p705 = pneg %p704
        $region42: #{tpu_custom_call.1} parent=31 // pred_check_branch
          %707 = sbr.rel (%p705) target = $region44
        $region43: #{tpu_custom_call.1} parent=31 // pred_region
          %v708 = vld [vmem:[#allocation4] sm:$0xff]
          %v709 = vld [vmem:[#allocation4 + $0x8] sm:$0xff]
          %v710 = vmax.f32 %v708, -0.9999999
          %v711 = vmax.f32 %v709, -0.9999999
          %v712 = vmin.f32 %v710, 0.9999999
          %v713 = vmin.f32 %v711, 0.9999999
          %v714 = vmul.f32 %v712, 0.87758255
          %v715 = vmul.f32 %v713, 0.87758255
          %v716 = vmul.f32 %v712, %v712
          %v717 = vmul.f32 %v713, %v713
          %v718 = vsub.f32 1.0, %v716
          %v719 = vsub.f32 1.0, %v717
          %v720 = vrsqrt.pop %v718
          %v721 = vmul.f32 %v718, %v720
          %vm722 = vcmp.eq.f32.partialorder %v718, inf
          %v723 = vsel %vm722, %v718, %v721
          %vm724 = vcmp.eq.f32.partialorder %v718, 0.0
          %v725 = vand.u32 %v718, 2147483648
          %v726 = vsel %vm724, %v725, %v723
          %v727 = vrsqrt.pop %v719
          %v728 = vmul.f32 %v719, %v727
          %vm729 = vcmp.eq.f32.partialorder %v719, inf
          %v730 = vsel %vm729, %v719, %v728
          %vm731 = vcmp.eq.f32.partialorder %v719, 0.0
          %v732 = vand.u32 %v719, 2147483648
          %v733 = vsel %vm731, %v732, %v730
          %v734 = vmul.f32 %v726, 0.47942555
          %v735 = vmul.f32 %v733, 0.47942555
          %v736 = vsub.f32 %v714, %v734
          %v737 = vsub.f32 %v715, %v735
          %v738 = vmul.f32 %v736, 64.0
          %v739 = vmul.f32 %v737, 64.0
          %v740 = vsub.f32 %v738, 64.0
          %v741 = vsub.f32 %v739, 64.0
          %v742 = vmul.f32 %v740, 1.442695
          %v743 = vpow.pop %v742
          %v744 = vmul.f32 %v741, 1.442695
          %v745 = vpow.pop %v744
          %v746 = vld [vmem:[#allocation3] sm:$0xff]
          %v747 = vld [vmem:[#allocation3 + $0x8] sm:$0xff]
          %v748 = vadd.f32 %v743, %v746
          %v749 = vadd.f32 %v745, %v747
          %v750 = vlog2.pop %v748
          %v751 = vmul.f32 %v750, 0.6931472
          %v752 = vlog2.pop %v749
          %v753 = vmul.f32 %v752, 0.6931472
          %v754 = vadd.f32 %v751, 64.0
          %v755 = vadd.f32 %v753, 64.0
          %v756 = vsub.f32 %v738, %v754
          %v757 = vsub.f32 %v739, %v755
          %758 = vst.msk [vmem:[%s247] sm:$0xff] %vm677, %v756
          %759 = vst.msk [vmem:[%s247 + $0x8] sm:$0xff] %vm677, %v757
        $region44: #{tpu_custom_call.1} parent=31 // pred_fallthru
          _
        %s760 = smul.u32 2, %s21
        %p761 = scmp.lt.s32.totalorder %s760, 1
        %s762 = scalar_select %p761, %s760, 1
        %s763 = smul.addr %s762, 8
        %s764 = scalar_lea.vmem %s3, %s763
        // Predicated region
        $region45: #{tpu_custom_call.1} parent=31 // pred_check
          %p765 = pneg %p125
        $region46: #{tpu_custom_call.1} parent=31 // pred_check_branch
          %767 = sbr.rel (%p765) target = $region48
        $region47: #{tpu_custom_call.1} parent=31 // pred_region
          %s768 = smul.u32 2, %s21
        $region48: #{tpu_custom_call.1} parent=31 // pred_fallthru
          _
        // Predicated region
        $region49: #{tpu_custom_call.1} parent=31 // pred_check
          %p769 = pneg %p125
        $region50: #{tpu_custom_call.1} parent=31 // pred_check_branch
          %771 = sbr.rel (%p769) target = $region52
        $region51: #{tpu_custom_call.1} parent=31 // pred_region
          %s772 = smul.u32 2, %s21
          %p773 = scmp.lt.s32.totalorder %s772, 1
          %s774 = scalar_select %p773, %s772, 1
          %s775 = smul.addr %s774, 8
          %s776 = scalar_lea.vmem %s3, %s775
        $region52: #{tpu_custom_call.1} parent=31 // pred_fallthru
          _
      $region32: #{tpu_custom_call.1} parent=5 // pred_fallthru
        _
      %p777 = scmp.le.s32.totalorder 2, %s12
      // Predicated region
      $region53: #{tpu_custom_call.1} parent=5 // pred_check
        %p778 = pneg %p777
      $region54: #{tpu_custom_call.1} parent=5 // pred_check_branch
        %780 = sbr.rel (%p778) target = $region56
      $region55: #{tpu_custom_call.1} parent=5 // pred_region
        %s781 = ssub.s32 %s12, 2
      $region56: #{tpu_custom_call.1} parent=5 // pred_fallthru
        _
    $region6: #{tpu_custom_call.1} parent=1 // loop_footer
      %s16 = sadd.s32 1, %s12
    $region7: #{tpu_custom_call.1} parent=1 // loop_footer_branch
      %11 = sbr.rel target = $region3
    $region8: #{tpu_custom_call.1} parent=1 // loop_exit
      _
    %782 = vsyncpa [#allocation6], 1
    %s783 = scalar_lea.sflag [#allocation6], 1
    %784 = vsyncpa %s783, 1

</llo_original>
